<compile_context>
chip_gen: v7x
topology: tpu7x:2x2x1
jax: 0.10.0
libtpu: 0.0.40
codegen_flags: <defaults>
</compile_context>

<pallas_src>
import functools

import jax
import jax.numpy as jnp
from jax import lax
from jax.experimental import pallas as pl
from jax.experimental.pallas import tpu as pltpu


def _round_up(x, m):
    return ((x + m - 1) // m) * m


def _pick_tile(n, target, align=128):
    """Largest multiple of `align` that divides n and is <= target.
    n must itself be a multiple of `align` (the wrapper pads to guarantee it)."""
    assert n % align == 0, (n, align)
    t = min(target, n)
    t -= t % align
    while t > align and n % t != 0:
        t -= align
    return max(t, align)


def _vmem_limit(nbytes):
    """Explicit scoped-VMEM limit: actual need + margin, floor 32 MiB, cap 100 MiB."""
    return int(min(max(nbytes + (8 << 20), 32 << 20), 100 << 20))


# ---------------------------------------------------------------------------
# Kernel 1 (per GCN layer): out = post( adj @ hw ),  hw = h @ W + b (hoisted).
# grid = (N//TM, N//TK), dimension_semantics = ("parallel", "arbitrary").
# post = mlp_act for hidden layers, row-L2-normalize for the last layer.
# ---------------------------------------------------------------------------
def gcn_layer_kernel(adj_ref, hw_ref, out_ref, acc_ref, *, act, normalize, eps):
    k = pl.program_id(1)

    @pl.when(k == 0)
    def _init():
        acc_ref[...] = jnp.zeros_like(acc_ref)

    # bf16 x bf16 -> f32 accumulation on the MXU (adj stream is HBM-bound).
    acc_ref[...] += jnp.dot(adj_ref[...], hw_ref[...],
                            preferred_element_type=jnp.float32)

    @pl.when(k == pl.num_programs(1) - 1)
    def _finalize():
        res = acc_ref[...]
        if normalize:
            # F.normalize(dim=1, p=2) == x * rsqrt(max(sum x^2, eps^2))  (EUP rsqrt).
            sumsq = jnp.sum(res * res, axis=-1, keepdims=True)
            out_ref[...] = res * lax.rsqrt(jnp.maximum(sumsq, eps * eps))
        else:
            if act == "relu":
                res = jnp.maximum(res, 0.0)
            elif act == "tanh":
                res = jnp.tanh(res)
            out_ref[...] = res


def gcn_layer(adj_bf, hw_bf, *, act, normalize, tm=1024, tk=1024, eps=1e-12):
    NP = adj_bf.shape[0]
    Dp = hw_bf.shape[1]
    TM = _pick_tile(NP, tm)
    TK = _pick_tile(NP, tk)
    # double-buffered adj + hw tiles, double-buffered out block, acc scratch
    vmem = (2 * TM * TK * 2 + 2 * TK * Dp * 2 + 2 * TM * Dp * 4 + TM * Dp * 4)
    return pl.pallas_call(
        functools.partial(gcn_layer_kernel, act=act, normalize=normalize, eps=eps),
        out_shape=jax.ShapeDtypeStruct((NP, Dp), jnp.float32),
        grid_spec=pltpu.PrefetchScalarGridSpec(
            num_scalar_prefetch=0,
            grid=(NP // TM, NP // TK),                      # reduction axis last
            in_specs=[
                pl.BlockSpec((TM, TK), lambda i, k: (i, k)),   # adj tile (bf16)
                pl.BlockSpec((TK, Dp), lambda i, k: (k, 0)),   # hw strip (bf16)
            ],
            out_specs=pl.BlockSpec((TM, Dp), lambda i, k: (i, 0)),
            scratch_shapes=[pltpu.VMEM((TM, Dp), jnp.float32)]),
        compiler_params=pltpu.CompilerParams(
            dimension_semantics=("parallel", "arbitrary"),
            vmem_limit_bytes=_vmem_limit(vmem)),
    )(adj_bf, hw_bf)


# ---------------------------------------------------------------------------
# Kernel 2: row-tiled similarity + top-(k+1) threshold + relu.
# grid = (N//TM,), row axis "parallel".
# ---------------------------------------------------------------------------
def sim_topk_kernel(hrow_ref, hT_ref, o_ref, *, kk):
    # S row block = hn_rows @ hn^T; hn^T was materialized once in the wrapper,
    # so the MXU sees the native (M,K)x(K,N) orientation (no in-kernel transpose).
    s = jnp.dot(hrow_ref[...], hT_ref[...], preferred_element_type=jnp.float32)

    # top-(kk) threshold = kk-th largest distinct value per row.  Each pass is a
    # read-only select + row-reduce on s; the loop carry is only (TM, 1) — no
    # (TM, N) work array is ever written back.
    # TODO(synk): matches torch.topk up to tie handling (ties can keep > kk entries).
    thresh = jnp.max(s, axis=-1, keepdims=True)
    for _ in range(kk - 1):
        thresh = jnp.max(jnp.where(s < thresh, s, -jnp.inf),
                         axis=-1, keepdims=True)

    # keep-mask and relu (apply_non_linearity) fused into a single select.
    o_ref[...] = jnp.where(s >= thresh, jnp.maximum(s, 0.0), 0.0)


def sim_topk(hn, kk, tm=256):
    NP, Dp = hn.shape
    hnT = hn.T          # one-time transpose in XLA; avoids XLU transposes in-kernel
    TM = _pick_tile(NP, tm)
    # hrow + hnT (double-buffered), out block (double-buffered), s + temporaries
    vmem = (2 * TM * Dp * 4 + 2 * Dp * NP * 4 + 2 * TM * NP * 4 + 3 * TM * NP * 4)
    return pl.pallas_call(
        functools.partial(sim_topk_kernel, kk=kk),
        out_shape=jax.ShapeDtypeStruct((NP, NP), jnp.float32),
        grid_spec=pltpu.PrefetchScalarGridSpec(
            num_scalar_prefetch=0,
            grid=(NP // TM,),
            in_specs=[
                pl.BlockSpec((TM, Dp), lambda i: (i, 0)),   # hn row tile
                pl.BlockSpec((Dp, NP), lambda i: (0, 0)),   # hn^T (resident)
            ],
            out_specs=pl.BlockSpec((TM, NP), lambda i: (i, 0))),
        compiler_params=pltpu.CompilerParams(
            dimension_semantics=("parallel",),
            vmem_limit_bytes=_vmem_limit(vmem)),
    )(hn, hnT)


# ------------------------------- full forward --------------------------------
def gcn_embed(features, adj, weights, biases, mlp_act="relu"):
    """internal_forward + F.normalize. Returns padded hn of shape [NP, Dp]
    (NP, Dp multiples of 128; padded rows/cols are exactly zero)."""
    N, D = features.shape
    L = len(weights)
    Dp = _round_up(max(D, 128), 128)
    NP = _round_up(N, 128)

    feat = jnp.pad(features.astype(jnp.float32), ((0, NP - N), (0, Dp - D)))
    adj_bf = jnp.pad(adj.astype(jnp.float32),
                     ((0, NP - N), (0, NP - N))).astype(jnp.bfloat16)
    Wp = [jnp.pad(w.astype(jnp.float32), ((0, Dp - D), (0, Dp - D))) for w in weights]
    Bp = [jnp.pad(b.astype(jnp.float32).reshape(1, D), ((0, 0), (0, Dp - D)))
          for b in biases]

    h = feat
    for l in range(L):
        # hw = h @ W_l + b_l: tiny [N,128]x[128,128] op hoisted out of the Pallas
        # kernel so the adj-matmul row axis can stay 'parallel' (megacore).
        hw = jnp.dot(h, Wp[l], preferred_element_type=jnp.float32,
                     precision=lax.Precision.HIGHEST) + Bp[l]
        h = gcn_layer(adj_bf, hw.astype(jnp.bfloat16),
                      act=mlp_act, normalize=(l == L - 1))
    return h


def gnn_learner_forward(features, adj, weights, biases, k, mlp_act="relu"):
    """Dense-mode GNN_learner.forward (sparse=False)."""
    N = features.shape[0]
    hn = gcn_embed(features, adj, weights, biases, mlp_act)
    out = sim_topk(hn, k + 1)
    return out[:N, :N]
    # TODO(synk): sparse branch (knn_fast + dgl.graph edge construction) has no
    # clean Pallas equivalent and is not implemented.


if __name__ == "__main__":
    import numpy as np

    key = jax.random.PRNGKey(0)
    N, D = 256, 32          # num_nodes, isize
    nlayers, k = 2, 4       # GCN depth, top-k neighbours
    mlp_act = "relu"

    kf, ka = jax.random.split(key)
    features = jax.random.normal(kf, (N, D), dtype=jnp.float32)

    # Deterministic dense adjacency: mostly-diagonal + row-normalized random
    # (keeps embeddings diverse so the top-k check below is numerically stable).
    adj_raw = jax.random.uniform(ka, (N, N), dtype=jnp.float32)
    adj = 0.8 * jnp.eye(N, dtype=jnp.float32) \
        + 0.2 * adj_raw / jnp.sum(adj_raw, axis=-1, keepdims=True)

    # param_init(): weight <- identity, bias <- 0 for every layer.
    weights = [jnp.eye(D, dtype=jnp.float32) for _ in range(nlayers)]
    biases = [jnp.zeros((1, D), dtype=jnp.float32) for _ in range(nlayers)]

    hn = gcn_embed(features, adj, weights, biases, mlp_act)        # kernel 1 (per layer)
    out = sim_topk(hn, k + 1)[:N, :N]                              # kernel 2
    out = jax.block_until_ready(out)

    # ---- kernel-1 check (reference mimics the kernel's bf16 adj/hw casts) ----
    adj_bf = adj.astype(jnp.bfloat16)
    h = features
    for li in range(nlayers):
        hw = jnp.dot(h, weights[li], preferred_element_type=jnp.float32,
                     precision=lax.Precision.HIGHEST) + biases[li]
        h = jnp.dot(adj_bf, hw.astype(jnp.bfloat16),
                    preferred_element_type=jnp.float32,
                    precision=lax.Precision.HIGHEST)
        if li != nlayers - 1 and mlp_act == "relu":
            h = jnp.maximum(h, 0.0)
        elif li != nlayers - 1 and mlp_act == "tanh":
            h = jnp.tanh(h)
    hn_ref = h / jnp.maximum(
        jnp.sqrt(jnp.sum(h * h, axis=-1, keepdims=True)), 1e-12)
    assert np.allclose(np.asarray(hn[:N, :D]), np.asarray(hn_ref),
                       atol=2e-2, rtol=5e-2)
    assert np.allclose(np.asarray(hn[:, D:]), 0.0)     # padded cols exactly zero
    assert np.allclose(np.asarray(hn[N:, :]), 0.0)     # padded rows exactly zero

    # ---- kernel-2 check: reference built from the kernel's own hn (f32) ----
    hn_f = hn[:N, :]
    s_ref = jnp.dot(hn_f, hn_f.T, preferred_element_type=jnp.float32,
                    precision=lax.Precision.HIGHEST)
    kth = jnp.sort(s_ref, axis=-1)[:, -(k + 1)][:, None]
    out_ref = jnp.where(s_ref >= kth, jnp.maximum(s_ref, 0.0), 0.0)

    assert out.shape == (N, N) and out.dtype == jnp.float32
    assert bool(jnp.all(jnp.isfinite(out))) and bool(jnp.all(out >= 0.0))
    nnz = jnp.sum(out > 0.0, axis=-1)
    assert bool(jnp.all(nnz >= 1)) and bool(jnp.all(nnz <= k + 3))
    # allow a handful of threshold-boundary flips from matmul rounding differences
    mismatch = float(jnp.mean((jnp.abs(out - out_ref) > 1e-3).astype(jnp.float32)))
    assert mismatch < 2e-3, mismatch

    print("KERNEL_OK")
</pallas_src>

<mosaic_0001>
module attributes {stable_mosaic.version = 11 : i64} {
  func.func @gcn_layer_kernel(%arg0: i32, %arg1: i32, %arg2: memref<256x256xbf16, #tpu.memory_space<vmem>>, %arg3: memref<256x128xbf16, #tpu.memory_space<vmem>>, %arg4: memref<256x128xf32, #tpu.memory_space<vmem>>, %arg5: memref<256x128xf32, #tpu.memory_space<vmem>>) attributes {dimension_semantics = [#tpu.dimension_semantics<parallel>, #tpu.dimension_semantics<arbitrary>], iteration_bounds = array<i64: 1, 1>, scalar_prefetch = 0 : i64, scratch_operands = 1 : i64, tpu.core_type = #tpu.core_type<tc>, window_params = [{transform_indices = @transform_0, window_bounds = array<i64: 256, 256>}, {transform_indices = @transform_1, window_bounds = array<i64: 256, 128>}, {transform_indices = @transform_2, window_bounds = array<i64: 256, 128>}]} {
    %c0_i32 = arith.constant 0 : i32
    %0 = arith.cmpi eq, %arg1, %c0_i32 : i32
    %1 = arith.extui %0 : i1 to i32
    %c0_i32_0 = arith.constant 0 : i32
    %2 = arith.cmpi ne, %1, %c0_i32_0 : i32
    scf.if %2 {
      %cst_10 = arith.constant 0.000000e+00 : f32
      %12 = vector.broadcast %cst_10 : f32 to vector<256x128xf32>
      %c0_11 = arith.constant 0 : index
      %c0_12 = arith.constant 0 : index
      %13 = vector.load %arg5[%c0_11, %c0_12] : memref<256x128xf32, #tpu.memory_space<vmem>>, vector<256x128xf32>
      tpu.vector_store %arg5[%c0_11, %c0_12], %12 {strides = array<i32>} : memref<256x128xf32, #tpu.memory_space<vmem>>, vector<256x128xf32>,
    } else {
    }
    %c0 = arith.constant 0 : index
    %c0_1 = arith.constant 0 : index
    %3 = vector.load %arg5[%c0, %c0_1] : memref<256x128xf32, #tpu.memory_space<vmem>>, vector<256x128xf32>
    %c0_2 = arith.constant 0 : index
    %c0_3 = arith.constant 0 : index
    %4 = vector.load %arg2[%c0_2, %c0_3] : memref<256x256xbf16, #tpu.memory_space<vmem>>, vector<256x256xbf16>
    %c0_4 = arith.constant 0 : index
    %c0_5 = arith.constant 0 : index
    %5 = vector.load %arg3[%c0_4, %c0_5] : memref<256x128xbf16, #tpu.memory_space<vmem>>, vector<256x128xbf16>
    %cst = arith.constant dense<0.000000e+00> : vector<256x128xf32>
    %6 = tpu.matmul %4, %5, %cst {dimension_numbers = #tpu.dot_dimension_numbers<[1], [0], [0], [1], [0, 0, 1, 1], [], []>} : vector<256x256xbf16>, vector<256x128xbf16>, vector<256x128xf32> -> vector<256x128xf32>
    %7 = arith.addf %3, %6 : vector<256x128xf32>
    %c0_6 = arith.constant 0 : index
    %c0_7 = arith.constant 0 : index
    %8 = vector.load %arg5[%c0_6, %c0_7] : memref<256x128xf32, #tpu.memory_space<vmem>>, vector<256x128xf32>
    tpu.vector_store %arg5[%c0_6, %c0_7], %7 {strides = array<i32>} : memref<256x128xf32, #tpu.memory_space<vmem>>, vector<256x128xf32>,
    %c0_i32_8 = arith.constant 0 : i32
    %9 = arith.cmpi eq, %arg1, %c0_i32_8 : i32
    %10 = arith.extui %9 : i1 to i32
    %c0_i32_9 = arith.constant 0 : i32
    %11 = arith.cmpi ne, %10, %c0_i32_9 : i32
    scf.if %11 {
      %c0_10 = arith.constant 0 : index
      %c0_11 = arith.constant 0 : index
      %12 = vector.load %arg5[%c0_10, %c0_11] : memref<256x128xf32, #tpu.memory_space<vmem>>, vector<256x128xf32>
      %cst_12 = arith.constant 0.000000e+00 : f32
      %13 = vector.broadcast %cst_12 : f32 to vector<256x128xf32>
      %14 = arith.maximumf %12, %13 : vector<256x128xf32>
      %c0_13 = arith.constant 0 : index
      %c0_14 = arith.constant 0 : index
      %15 = vector.load %arg4[%c0_13, %c0_14] : memref<256x128xf32, #tpu.memory_space<vmem>>, vector<256x128xf32>
      tpu.vector_store %arg4[%c0_13, %c0_14], %14 {strides = array<i32>} : memref<256x128xf32, #tpu.memory_space<vmem>>, vector<256x128xf32>,
    } else {
    }
    return
  }
  func.func @transform_0(%arg0: i32, %arg1: i32) -> (i32, i32) {
    %c0_i32 = arith.constant 0 : i32
    return %arg0, %arg1 : i32, i32
  }
  func.func @transform_1(%arg0: i32, %arg1: i32) -> (i32, i32) {
    %c0_i32 = arith.constant 0 : i32
    %c0_i32_0 = arith.constant 0 : i32
    return %arg1, %c0_i32 : i32, i32
  }
  func.func @transform_2(%arg0: i32, %arg1: i32) -> (i32, i32) {
    %c0_i32 = arith.constant 0 : i32
    %c0_i32_0 = arith.constant 0 : i32
    return %arg0, %c0_i32 : i32, i32
  }
}

</mosaic_0001>

<llo_original>
// kernel: tpu_custom_call.1
$region0: #{tpu_custom_call.1}
  #allocation0 [shape = 'u32[]', space=smem, size = 0x4, offset = 0x4, fixed_abs, tag = 'smem constant byte address 0x4 - core index']
  #allocation1 [shape = 'u32[144,128]{1,0:T(1,128)}', space=vmem, size = 0x12000, scoped, tag = 'internal scratch']
  #allocation2 [shape = 'f32[256,128]{1,0:T(8,128)}', space=vmem, size = 0x20000, scoped, tag = 'scratch operand']
  %s0 = inlined_call_operand.hbm [shape: bf16[256,256], index: 0, kind: input, shape index: {}]
  %s1 = inlined_call_operand.hbm [shape: bf16[256,128], index: 1, kind: input, shape index: {}]
  %s2 = inlined_call_operand.hbm [shape: f32[256,128], index: 2, kind: output, shape index: {}]
  %s3 = sld [smem:[#allocation0]]
  $region34: #{tpu_custom_call.1} parent=0
    _
  %s5 = ssub.s32 1, %s3
  %s6 = scalar_select 0, %s5, %s3
  $region1: #{tpu_custom_call.1} parent=0
    #allocation3 [shape = 'u8[131072]{0}', space=vmem, size = 0x20000, scoped, tag = 'input window, operand 0, single buffered']
    #allocation4 [shape = 's32[1]{0}', space=sflag, size = 0x4, scoped, tag = 'scoped memory for tpu_custom_call.1']
    #allocation5 [shape = 's32[1]{0}', space=sflag, size = 0x4, scoped, tag = 'scoped memory for tpu_custom_call.1']
    #allocation6 [shape = 'u8[65536]{0}', space=vmem, size = 0x10000, scoped, tag = 'input window, operand 1, single buffered']
    #allocation7 [shape = 's32[1]{0}', space=sflag, size = 0x4, scoped, tag = 'scoped memory for tpu_custom_call.1']
    #allocation8 [shape = 'u8[131072]{0}', space=vmem, size = 0x20000, scoped, tag = 'output window, operand 0, single buffered']
    %7 = vsyncpa [#allocation4], 0
    %8 = vsyncpa [#allocation7], 0
    %9 = vsyncpa [#allocation5], 0
    // Predicated region
    $region2: #{tpu_custom_call.1} parent=1 // pred_check
      _
    $region3: #{tpu_custom_call.1} parent=1 // pred_check_branch
      %11 = sbr.rel (0) target = $region5
    $region4: #{tpu_custom_call.1} parent=1 // pred_region
      %s13 = ssub.s32 4096, 4096
      %14 = vsyncadd [#allocation4], %s13
      %s15 = sshll.u32 [#allocation3], 4
      %s16 = int_to_ptr.vmem [resolvable:$true] %s15
      %21 = dma.hbm_to_vmem [thread:$0]  %s0, 4096, %s16, [#allocation4], 128, 128, 8
    $region5: #{tpu_custom_call.1} parent=1 // pred_fallthru
      _
    // Predicated region
    $region6: #{tpu_custom_call.1} parent=1 // pred_check
      _
    $region7: #{tpu_custom_call.1} parent=1 // pred_check_branch
      %23 = sbr.rel (0) target = $region9
    $region8: #{tpu_custom_call.1} parent=1 // pred_region
      %s25 = ssub.s32 2048, 2048
      %26 = vsyncadd [#allocation7], %s25
      %s27 = sshll.u32 [#allocation6], 4
      %s28 = int_to_ptr.vmem [resolvable:$true] %s27
      %33 = dma.hbm_to_vmem [thread:$0]  %s1, 2048, %s28, [#allocation7], 64, 64, 4
    $region9: #{tpu_custom_call.1} parent=1 // pred_fallthru
      _
    // Predicated region
    $region10: #{tpu_custom_call.1} parent=1 // pred_check
      _
    $region11: #{tpu_custom_call.1} parent=1 // pred_check_branch
      %35 = sbr.rel (0) target = $region13
    $region12: #{tpu_custom_call.1} parent=1 // pred_region
      %36 = dma.done [#allocation4], 4096
    $region13: #{tpu_custom_call.1} parent=1 // pred_fallthru
      _
    // Predicated region
    $region14: #{tpu_custom_call.1} parent=1 // pred_check
      _
    $region15: #{tpu_custom_call.1} parent=1 // pred_check_branch
      %38 = sbr.rel (0) target = $region17
    $region16: #{tpu_custom_call.1} parent=1 // pred_region
      %39 = dma.done [#allocation7], 2048
    $region17: #{tpu_custom_call.1} parent=1 // pred_fallthru
      _
    %p41 = scmp.eq.s32.totalorder 0, 0
    // Predicated region
    $region18: #{tpu_custom_call.1} parent=1 // pred_check
      %p42 = pneg %p41
    $region19: #{tpu_custom_call.1} parent=1 // pred_check_branch
      %44 = sbr.rel (%p42) target = $region21
    $region20: #{tpu_custom_call.1} parent=1 // pred_region
      %45 = vst [vmem:[#allocation2] sm:$0xff] 0.0
      %46 = vst [vmem:[#allocation2 + $0x8] sm:$0xff] 0.0
      %47 = vst [vmem:[#allocation2 + $0x10] sm:$0xff] 0.0
      %48 = vst [vmem:[#allocation2 + $0x18] sm:$0xff] 0.0
      %49 = vst [vmem:[#allocation2 + $0x20] sm:$0xff] 0.0
      %50 = vst [vmem:[#allocation2 + $0x28] sm:$0xff] 0.0
      %51 = vst [vmem:[#allocation2 + $0x30] sm:$0xff] 0.0
      %52 = vst [vmem:[#allocation2 + $0x38] sm:$0xff] 0.0
      %53 = vst [vmem:[#allocation2 + $0x40] sm:$0xff] 0.0
      %54 = vst [vmem:[#allocation2 + $0x48] sm:$0xff] 0.0
      %55 = vst [vmem:[#allocation2 + $0x50] sm:$0xff] 0.0
      %56 = vst [vmem:[#allocation2 + $0x58] sm:$0xff] 0.0
      %57 = vst [vmem:[#allocation2 + $0x60] sm:$0xff] 0.0
      %58 = vst [vmem:[#allocation2 + $0x68] sm:$0xff] 0.0
      %59 = vst [vmem:[#allocation2 + $0x70] sm:$0xff] 0.0
      %60 = vst [vmem:[#allocation2 + $0x78] sm:$0xff] 0.0
      %61 = vst [vmem:[#allocation2 + $0x80] sm:$0xff] 0.0
      %62 = vst [vmem:[#allocation2 + $0x88] sm:$0xff] 0.0
      %63 = vst [vmem:[#allocation2 + $0x90] sm:$0xff] 0.0
      %64 = vst [vmem:[#allocation2 + $0x98] sm:$0xff] 0.0
      %65 = vst [vmem:[#allocation2 + $0xa0] sm:$0xff] 0.0
      %66 = vst [vmem:[#allocation2 + $0xa8] sm:$0xff] 0.0
      %67 = vst [vmem:[#allocation2 + $0xb0] sm:$0xff] 0.0
      %68 = vst [vmem:[#allocation2 + $0xb8] sm:$0xff] 0.0
      %69 = vst [vmem:[#allocation2 + $0xc0] sm:$0xff] 0.0
      %70 = vst [vmem:[#allocation2 + $0xc8] sm:$0xff] 0.0
      %71 = vst [vmem:[#allocation2 + $0xd0] sm:$0xff] 0.0
      %72 = vst [vmem:[#allocation2 + $0xd8] sm:$0xff] 0.0
      %73 = vst [vmem:[#allocation2 + $0xe0] sm:$0xff] 0.0
      %74 = vst [vmem:[#allocation2 + $0xe8] sm:$0xff] 0.0
      %75 = vst [vmem:[#allocation2 + $0xf0] sm:$0xff] 0.0
      %76 = vst [vmem:[#allocation2 + $0xf8] sm:$0xff] 0.0
    $region21: #{tpu_custom_call.1} parent=1 // pred_fallthru
      _
    %v77 = vld [vmem:[#allocation2] sm:$0xff]
    %v78 = vld [vmem:[#allocation2 + $0x8] sm:$0xff]
    %v79 = vld [vmem:[#allocation2 + $0x10] sm:$0xff]
    %v80 = vld [vmem:[#allocation2 + $0x18] sm:$0xff]
    %v81 = vld [vmem:[#allocation2 + $0x20] sm:$0xff]
    %v82 = vld [vmem:[#allocation2 + $0x28] sm:$0xff]
    %v83 = vld [vmem:[#allocation2 + $0x30] sm:$0xff]
    %v84 = vld [vmem:[#allocation2 + $0x38] sm:$0xff]
    %v85 = vld [vmem:[#allocation2 + $0x40] sm:$0xff]
    %v86 = vld [vmem:[#allocation2 + $0x48] sm:$0xff]
    %v87 = vld [vmem:[#allocation2 + $0x50] sm:$0xff]
    %v88 = vld [vmem:[#allocation2 + $0x58] sm:$0xff]
    %v89 = vld [vmem:[#allocation2 + $0x60] sm:$0xff]
    %v90 = vld [vmem:[#allocation2 + $0x68] sm:$0xff]
    %v91 = vld [vmem:[#allocation2 + $0x70] sm:$0xff]
    %v92 = vld [vmem:[#allocation2 + $0x78] sm:$0xff]
    %v93 = vld [vmem:[#allocation2 + $0x80] sm:$0xff]
    %v94 = vld [vmem:[#allocation2 + $0x88] sm:$0xff]
    %v95 = vld [vmem:[#allocation2 + $0x90] sm:$0xff]
    %v96 = vld [vmem:[#allocation2 + $0x98] sm:$0xff]
    %v97 = vld [vmem:[#allocation2 + $0xa0] sm:$0xff]
    %v98 = vld [vmem:[#allocation2 + $0xa8] sm:$0xff]
    %v99 = vld [vmem:[#allocation2 + $0xb0] sm:$0xff]
    %v100 = vld [vmem:[#allocation2 + $0xb8] sm:$0xff]
    %v101 = vld [vmem:[#allocation2 + $0xc0] sm:$0xff]
    %v102 = vld [vmem:[#allocation2 + $0xc8] sm:$0xff]
    %v103 = vld [vmem:[#allocation2 + $0xd0] sm:$0xff]
    %v104 = vld [vmem:[#allocation2 + $0xd8] sm:$0xff]
    %v105 = vld [vmem:[#allocation2 + $0xe0] sm:$0xff]
    %v106 = vld [vmem:[#allocation2 + $0xe8] sm:$0xff]
    %v107 = vld [vmem:[#allocation2 + $0xf0] sm:$0xff]
    %v108 = vld [vmem:[#allocation2 + $0xf8] sm:$0xff]
    %v109 = vld [vmem:[#allocation3] sm:$0xff]
    %v110 = vld [vmem:[#allocation3 + $0x8] sm:$0xff]
    %v111 = vld [vmem:[#allocation3 + $0x10] sm:$0xff]
    %v112 = vld [vmem:[#allocation3 + $0x18] sm:$0xff]
    %v113 = vld [vmem:[#allocation3 + $0x20] sm:$0xff]
    %v114 = vld [vmem:[#allocation3 + $0x28] sm:$0xff]
    %v115 = vld [vmem:[#allocation3 + $0x30] sm:$0xff]
    %v116 = vld [vmem:[#allocation3 + $0x38] sm:$0xff]
    %v117 = vld [vmem:[#allocation3 + $0x40] sm:$0xff]
    %v118 = vld [vmem:[#allocation3 + $0x48] sm:$0xff]
    %v119 = vld [vmem:[#allocation3 + $0x50] sm:$0xff]
    %v120 = vld [vmem:[#allocation3 + $0x58] sm:$0xff]
    %v121 = vld [vmem:[#allocation3 + $0x60] sm:$0xff]
    %v122 = vld [vmem:[#allocation3 + $0x68] sm:$0xff]
    %v123 = vld [vmem:[#allocation3 + $0x70] sm:$0xff]
    %v124 = vld [vmem:[#allocation3 + $0x78] sm:$0xff]
    %v125 = vld [vmem:[#allocation3 + $0x80] sm:$0xff]
    %v126 = vld [vmem:[#allocation3 + $0x88] sm:$0xff]
    %v127 = vld [vmem:[#allocation3 + $0x90] sm:$0xff]
    %v128 = vld [vmem:[#allocation3 + $0x98] sm:$0xff]
    %v129 = vld [vmem:[#allocation3 + $0xa0] sm:$0xff]
    %v130 = vld [vmem:[#allocation3 + $0xa8] sm:$0xff]
    %v131 = vld [vmem:[#allocation3 + $0xb0] sm:$0xff]
    %v132 = vld [vmem:[#allocation3 + $0xb8] sm:$0xff]
    %v133 = vld [vmem:[#allocation3 + $0xc0] sm:$0xff]
    %v134 = vld [vmem:[#allocation3 + $0xc8] sm:$0xff]
    %v135 = vld [vmem:[#allocation3 + $0xd0] sm:$0xff]
    %v136 = vld [vmem:[#allocation3 + $0xd8] sm:$0xff]
    %v137 = vld [vmem:[#allocation3 + $0xe0] sm:$0xff]
    %v138 = vld [vmem:[#allocation3 + $0xe8] sm:$0xff]
    %v139 = vld [vmem:[#allocation3 + $0xf0] sm:$0xff]
    %v140 = vld [vmem:[#allocation3 + $0xf8] sm:$0xff]
    %v141 = vld [vmem:[#allocation6] sm:$0xf]
    %v142 = vld [vmem:[#allocation6 + $0x4] sm:$0xf]
    %v143 = vld [vmem:[#allocation6 + $0x8] sm:$0xf]
    %v144 = vld [vmem:[#allocation6 + $0xc] sm:$0xf]
    %v145 = vld [vmem:[#allocation6 + $0x10] sm:$0xf]
    %v146 = vld [vmem:[#allocation6 + $0x14] sm:$0xf]
    %v147 = vld [vmem:[#allocation6 + $0x18] sm:$0xf]
    %v148 = vld [vmem:[#allocation6 + $0x1c] sm:$0xf]
    %v149 = vld [vmem:[#allocation6 + $0x20] sm:$0xf]
    %v150 = vld [vmem:[#allocation6 + $0x24] sm:$0xf]
    %v151 = vld [vmem:[#allocation6 + $0x28] sm:$0xf]
    %v152 = vld [vmem:[#allocation6 + $0x2c] sm:$0xf]
    %v153 = vld [vmem:[#allocation6 + $0x30] sm:$0xf]
    %v154 = vld [vmem:[#allocation6 + $0x34] sm:$0xf]
    %v155 = vld [vmem:[#allocation6 + $0x38] sm:$0xf]
    %v156 = vld [vmem:[#allocation6 + $0x3c] sm:$0xf]
    %v157 = vld [vmem:[#allocation6 + $0x40] sm:$0xf]
    %v158 = vld [vmem:[#allocation6 + $0x44] sm:$0xf]
    %v159 = vld [vmem:[#allocation6 + $0x48] sm:$0xf]
    %v160 = vld [vmem:[#allocation6 + $0x4c] sm:$0xf]
    %v161 = vld [vmem:[#allocation6 + $0x50] sm:$0xf]
    %v162 = vld [vmem:[#allocation6 + $0x54] sm:$0xf]
    %v163 = vld [vmem:[#allocation6 + $0x58] sm:$0xf]
    %v164 = vld [vmem:[#allocation6 + $0x5c] sm:$0xf]
    %v165 = vld [vmem:[#allocation6 + $0x60] sm:$0xf]
    %v166 = vld [vmem:[#allocation6 + $0x64] sm:$0xf]
    %v167 = vld [vmem:[#allocation6 + $0x68] sm:$0xf]
    %v168 = vld [vmem:[#allocation6 + $0x6c] sm:$0xf]
    %v169 = vld [vmem:[#allocation6 + $0x70] sm:$0xf]
    %v170 = vld [vmem:[#allocation6 + $0x74] sm:$0xf]
    %v171 = vld [vmem:[#allocation6 + $0x78] sm:$0xf]
    %v172 = vld [vmem:[#allocation6 + $0x7c] sm:$0xf]
    %v205 = vunpack.c.l.b16 %v109
    %v206 = vunpack.c.h.b16 %v109
    %v207 = vunpack.c.l.b16 %v110
    %v208 = vunpack.c.h.b16 %v110
    %v209 = vunpack.c.l.b16 %v111
    %v210 = vunpack.c.h.b16 %v111
    %v211 = vunpack.c.l.b16 %v112
    %v212 = vunpack.c.h.b16 %v112
    %v213 = vunpack.c.l.b16 %v113
    %v214 = vunpack.c.h.b16 %v113
    %v215 = vunpack.c.l.b16 %v114
    %v216 = vunpack.c.h.b16 %v114
    %v217 = vunpack.c.l.b16 %v115
    %v218 = vunpack.c.h.b16 %v115
    %v219 = vunpack.c.l.b16 %v116
    %v220 = vunpack.c.h.b16 %v116
    %v221 = vunpack.c.l.b16 %v117
    %v222 = vunpack.c.h.b16 %v117
    %v223 = vunpack.c.l.b16 %v118
    %v224 = vunpack.c.h.b16 %v118
    %v225 = vunpack.c.l.b16 %v119
    %v226 = vunpack.c.h.b16 %v119
    %v227 = vunpack.c.l.b16 %v120
    %v228 = vunpack.c.h.b16 %v120
    %v229 = vunpack.c.l.b16 %v121
    %v230 = vunpack.c.h.b16 %v121
    %v231 = vunpack.c.l.b16 %v122
    %v232 = vunpack.c.h.b16 %v122
    %v233 = vunpack.c.l.b16 %v123
    %v234 = vunpack.c.h.b16 %v123
    %v235 = vunpack.c.l.b16 %v124
    %v236 = vunpack.c.h.b16 %v124
    %v237 = vunpack.c.l.b16 %v125
    %v238 = vunpack.c.h.b16 %v125
    %v239 = vunpack.c.l.b16 %v126
    %v240 = vunpack.c.h.b16 %v126
    %v241 = vunpack.c.l.b16 %v127
    %v242 = vunpack.c.h.b16 %v127
    %v243 = vunpack.c.l.b16 %v128
    %v244 = vunpack.c.h.b16 %v128
    %v245 = vunpack.c.l.b16 %v129
    %v246 = vunpack.c.h.b16 %v129
    %v247 = vunpack.c.l.b16 %v130
    %v248 = vunpack.c.h.b16 %v130
    %v249 = vunpack.c.l.b16 %v131
    %v250 = vunpack.c.h.b16 %v131
    %v251 = vunpack.c.l.b16 %v132
    %v252 = vunpack.c.h.b16 %v132
    %v253 = vunpack.c.l.b16 %v133
    %v254 = vunpack.c.h.b16 %v133
    %v255 = vunpack.c.l.b16 %v134
    %v256 = vunpack.c.h.b16 %v134
    %v257 = vunpack.c.l.b16 %v135
    %v258 = vunpack.c.h.b16 %v135
    %v259 = vunpack.c.l.b16 %v136
    %v260 = vunpack.c.h.b16 %v136
    %v261 = vunpack.c.l.b16 %v137
    %v262 = vunpack.c.h.b16 %v137
    %v263 = vunpack.c.l.b16 %v138
    %v264 = vunpack.c.h.b16 %v138
    %v265 = vunpack.c.l.b16 %v139
    %v266 = vunpack.c.h.b16 %v139
    %v267 = vunpack.c.l.b16 %v140
    %v268 = vunpack.c.h.b16 %v140
    %v269 = vpack.c.b16 %v207, %v205
    %v270 = vpack.c.b16 %v208, %v206
    %v271 = vpack.c.b16 %v211, %v209
    %v272 = vpack.c.b16 %v212, %v210
    %v273 = vpack.c.b16 %v215, %v213
    %v274 = vpack.c.b16 %v216, %v214
    %v275 = vpack.c.b16 %v219, %v217
    %v276 = vpack.c.b16 %v220, %v218
    %v277 = vpack.c.b16 %v223, %v221
    %v278 = vpack.c.b16 %v224, %v222
    %v279 = vpack.c.b16 %v227, %v225
    %v280 = vpack.c.b16 %v228, %v226
    %v281 = vpack.c.b16 %v231, %v229
    %v282 = vpack.c.b16 %v232, %v230
    %v283 = vpack.c.b16 %v235, %v233
    %v284 = vpack.c.b16 %v236, %v234
    %v285 = vpack.c.b16 %v239, %v237
    %v286 = vpack.c.b16 %v240, %v238
    %v287 = vpack.c.b16 %v243, %v241
    %v288 = vpack.c.b16 %v244, %v242
    %v289 = vpack.c.b16 %v247, %v245
    %v290 = vpack.c.b16 %v248, %v246
    %v291 = vpack.c.b16 %v251, %v249
    %v292 = vpack.c.b16 %v252, %v250
    %v293 = vpack.c.b16 %v255, %v253
    %v294 = vpack.c.b16 %v256, %v254
    %v295 = vpack.c.b16 %v259, %v257
    %v296 = vpack.c.b16 %v260, %v258
    %v297 = vpack.c.b16 %v263, %v261
    %v298 = vpack.c.b16 %v264, %v262
    %v299 = vpack.c.b16 %v267, %v265
    %v300 = vpack.c.b16 %v268, %v266
    %v365 = vunpack.c.l.b16 %v141
    %v366 = vunpack.c.l.b16 %v142
    %v367 = vunpack.c.l.b16 %v143
    %v368 = vunpack.c.l.b16 %v144
    %v369 = vunpack.c.l.b16 %v145
    %v370 = vunpack.c.l.b16 %v146
    %v371 = vunpack.c.l.b16 %v147
    %v372 = vunpack.c.l.b16 %v148
    %v373 = vunpack.c.l.b16 %v149
    %v374 = vunpack.c.l.b16 %v150
    %v375 = vunpack.c.l.b16 %v151
    %v376 = vunpack.c.l.b16 %v152
    %v377 = vunpack.c.l.b16 %v153
    %v378 = vunpack.c.l.b16 %v154
    %v379 = vunpack.c.l.b16 %v155
    %v380 = vunpack.c.l.b16 %v156
    %v381 = vunpack.c.l.b16 %v157
    %v382 = vunpack.c.l.b16 %v158
    %v383 = vunpack.c.l.b16 %v159
    %v384 = vunpack.c.l.b16 %v160
    %v385 = vunpack.c.l.b16 %v161
    %v386 = vunpack.c.l.b16 %v162
    %v387 = vunpack.c.l.b16 %v163
    %v388 = vunpack.c.l.b16 %v164
    %v389 = vunpack.c.l.b16 %v165
    %v390 = vunpack.c.l.b16 %v166
    %v391 = vunpack.c.l.b16 %v167
    %v392 = vunpack.c.l.b16 %v168
    %v393 = vunpack.c.l.b16 %v169
    %v394 = vunpack.c.l.b16 %v170
    %v395 = vunpack.c.l.b16 %v171
    %v396 = vunpack.c.l.b16 %v172
    %v397 = vpack.c.b16 %v366, %v365
    %v398 = vpack.c.b16 %v368, %v367
    %v399 = vpack.c.b16 %v370, %v369
    %v400 = vpack.c.b16 %v372, %v371
    %v401 = vpack.c.b16 %v374, %v373
    %v402 = vpack.c.b16 %v376, %v375
    %v403 = vpack.c.b16 %v378, %v377
    %v404 = vpack.c.b16 %v380, %v379
    %v405 = vpack.c.b16 %v382, %v381
    %v406 = vpack.c.b16 %v384, %v383
    %v407 = vpack.c.b16 %v386, %v385
    %v408 = vpack.c.b16 %v388, %v387
    %v409 = vpack.c.b16 %v390, %v389
    %v410 = vpack.c.b16 %v392, %v391
    %v411 = vpack.c.b16 %v394, %v393
    %v412 = vpack.c.b16 %v396, %v395
    %429 = vmatprep.subr.bf16.mxu0 0
    %430 = vmatpush1.bf16.msra.mxu0 %v397
    %431 = vmatprep.subr.bf16.mxu0 0
    %432 = vmatpush1.bf16.msra.mxu0 %v398
    %433 = vmatprep.subr.bf16.mxu0 0
    %434 = vmatpush1.bf16.msra.mxu0 %v399
    %435 = vmatprep.subr.bf16.mxu0 0
    %436 = vmatpush1.bf16.msra.mxu0 %v400
    %437 = vmatprep.subr.bf16.mxu0 0
    %438 = vmatpush1.bf16.msra.mxu0 %v401
    %439 = vmatprep.subr.bf16.mxu0 0
    %440 = vmatpush1.bf16.msra.mxu0 %v402
    %441 = vmatprep.subr.bf16.mxu0 0
    %442 = vmatpush1.bf16.msra.mxu0 %v403
    %443 = vmatprep.subr.bf16.mxu0 0
    %444 = vmatpush1.bf16.msra.mxu0 %v404
    %445 = vmatprep.subr.bf16.mxu0 0
    %446 = vmatpush1.bf16.msra.mxu0 %v405
    %447 = vmatprep.subr.bf16.mxu0 0
    %448 = vmatpush1.bf16.msra.mxu0 %v406
    %449 = vmatprep.subr.bf16.mxu0 0
    %450 = vmatpush1.bf16.msra.mxu0 %v407
    %451 = vmatprep.subr.bf16.mxu0 0
    %452 = vmatpush1.bf16.msra.mxu0 %v408
    %453 = vmatprep.subr.bf16.mxu0 0
    %454 = vmatpush1.bf16.msra.mxu0 %v409
    %455 = vmatprep.subr.bf16.mxu0 0
    %456 = vmatpush1.bf16.msra.mxu0 %v410
    %457 = vmatprep.subr.bf16.mxu0 0
    %458 = vmatpush1.bf16.msra.mxu0 %v411
    %459 = vmatprep.subr.bf16.mxu0 0
    %460 = vmatpush1.bf16.msra.mxu0 %v412
    %461 = vmatprep.mubr.bf16.mxu0 %v270
    %462 = vmatmul.mubr.bf16.gmra.mrb[0].mxu0 %v269
    %v463 = vpop.f32.mrb[0].mxu0
    %v464 = vadd.f32 0.0, %v463
    %v465 = vpop.f32.mrb[0].mxu0
    %v466 = vpop.f32.mrb[0].mxu0
    %v467 = vadd.f32 0.0, %v466
    %v468 = vpop.f32.mrb[0].mxu0
    %469 = vmatprep.mubr.bf16.mxu0 %v272
    %470 = vmatmul.mubr.bf16.gmra.mrb[0].mxu0 %v271
    %v471 = vpop.f32.mrb[0].mxu0
    %v472 = vadd.f32 0.0, %v471
    %v473 = vpop.f32.mrb[0].mxu0
    %v474 = vpop.f32.mrb[0].mxu0
    %v475 = vadd.f32 0.0, %v474
    %v476 = vpop.f32.mrb[0].mxu0
    %477 = vmatprep.mubr.bf16.mxu0 %v274
    %478 = vmatmul.mubr.bf16.gmra.mrb[0].mxu0 %v273
    %v479 = vpop.f32.mrb[0].mxu0
    %v480 = vadd.f32 0.0, %v479
    %v481 = vpop.f32.mrb[0].mxu0
    %v482 = vpop.f32.mrb[0].mxu0
    %v483 = vadd.f32 0.0, %v482
    %v484 = vpop.f32.mrb[0].mxu0
    %485 = vmatprep.mubr.bf16.mxu0 %v276
    %486 = vmatmul.mubr.bf16.gmra.mrb[0].mxu0 %v275
    %v487 = vpop.f32.mrb[0].mxu0
    %v488 = vadd.f32 0.0, %v487
    %v489 = vpop.f32.mrb[0].mxu0
    %v490 = vpop.f32.mrb[0].mxu0
    %v491 = vadd.f32 0.0, %v490
    %v492 = vpop.f32.mrb[0].mxu0
    %493 = vmatprep.mubr.bf16.mxu0 %v278
    %494 = vmatmul.mubr.bf16.gmra.mrb[0].mxu0 %v277
    %v495 = vpop.f32.mrb[0].mxu0
    %v496 = vadd.f32 0.0, %v495
    %v497 = vpop.f32.mrb[0].mxu0
    %v498 = vpop.f32.mrb[0].mxu0
    %v499 = vadd.f32 0.0, %v498
    %v500 = vpop.f32.mrb[0].mxu0
    %501 = vmatprep.mubr.bf16.mxu0 %v280
    %502 = vmatmul.mubr.bf16.gmra.mrb[0].mxu0 %v279
    %v503 = vpop.f32.mrb[0].mxu0
    %v504 = vadd.f32 0.0, %v503
    %v505 = vpop.f32.mrb[0].mxu0
    %v506 = vpop.f32.mrb[0].mxu0
    %v507 = vadd.f32 0.0, %v506
    %v508 = vpop.f32.mrb[0].mxu0
    %509 = vmatprep.mubr.bf16.mxu0 %v282
    %510 = vmatmul.mubr.bf16.gmra.mrb[0].mxu0 %v281
    %v511 = vpop.f32.mrb[0].mxu0
    %v512 = vadd.f32 0.0, %v511
    %v513 = vpop.f32.mrb[0].mxu0
    %v514 = vpop.f32.mrb[0].mxu0
    %v515 = vadd.f32 0.0, %v514
    %v516 = vpop.f32.mrb[0].mxu0
    %517 = vmatprep.mubr.bf16.mxu0 %v284
    %518 = vmatmul.mubr.bf16.gmra.mrb[0].mxu0 %v283
    %v519 = vpop.f32.mrb[0].mxu0
    %v520 = vadd.f32 0.0, %v519
    %v521 = vpop.f32.mrb[0].mxu0
    %v522 = vpop.f32.mrb[0].mxu0
    %v523 = vadd.f32 0.0, %v522
    %v524 = vpop.f32.mrb[0].mxu0
    %525 = vmatprep.mubr.bf16.mxu0 %v286
    %526 = vmatmul.mubr.bf16.gmra.mrb[0].mxu0 %v285
    %v527 = vpop.f32.mrb[0].mxu0
    %v528 = vadd.f32 0.0, %v527
    %v529 = vpop.f32.mrb[0].mxu0
    %v530 = vpop.f32.mrb[0].mxu0
    %v531 = vadd.f32 0.0, %v530
    %v532 = vpop.f32.mrb[0].mxu0
    %533 = vmatprep.mubr.bf16.mxu0 %v288
    %534 = vmatmul.mubr.bf16.gmra.mrb[0].mxu0 %v287
    %v535 = vpop.f32.mrb[0].mxu0
    %v536 = vadd.f32 0.0, %v535
    %v537 = vpop.f32.mrb[0].mxu0
    %v538 = vpop.f32.mrb[0].mxu0
    %v539 = vadd.f32 0.0, %v538
    %v540 = vpop.f32.mrb[0].mxu0
    %541 = vmatprep.mubr.bf16.mxu0 %v290
    %542 = vmatmul.mubr.bf16.gmra.mrb[0].mxu0 %v289
    %v543 = vpop.f32.mrb[0].mxu0
    %v544 = vadd.f32 0.0, %v543
    %v545 = vpop.f32.mrb[0].mxu0
    %v546 = vpop.f32.mrb[0].mxu0
    %v547 = vadd.f32 0.0, %v546
    %v548 = vpop.f32.mrb[0].mxu0
    %549 = vmatprep.mubr.bf16.mxu0 %v292
    %550 = vmatmul.mubr.bf16.gmra.mrb[0].mxu0 %v291
    %v551 = vpop.f32.mrb[0].mxu0
    %v552 = vadd.f32 0.0, %v551
    %v553 = vpop.f32.mrb[0].mxu0
    %v554 = vpop.f32.mrb[0].mxu0
    %v555 = vadd.f32 0.0, %v554
    %v556 = vpop.f32.mrb[0].mxu0
    %557 = vmatprep.mubr.bf16.mxu0 %v294
    %558 = vmatmul.mubr.bf16.gmra.mrb[0].mxu0 %v293
    %v559 = vpop.f32.mrb[0].mxu0
    %v560 = vadd.f32 0.0, %v559
    %v561 = vpop.f32.mrb[0].mxu0
    %v562 = vpop.f32.mrb[0].mxu0
    %v563 = vadd.f32 0.0, %v562
    %v564 = vpop.f32.mrb[0].mxu0
    %565 = vmatprep.mubr.bf16.mxu0 %v296
    %566 = vmatmul.mubr.bf16.gmra.mrb[0].mxu0 %v295
    %v567 = vpop.f32.mrb[0].mxu0
    %v568 = vadd.f32 0.0, %v567
    %v569 = vpop.f32.mrb[0].mxu0
    %v570 = vpop.f32.mrb[0].mxu0
    %v571 = vadd.f32 0.0, %v570
    %v572 = vpop.f32.mrb[0].mxu0
    %573 = vmatprep.mubr.bf16.mxu0 %v298
    %574 = vmatmul.mubr.bf16.gmra.mrb[0].mxu0 %v297
    %v575 = vpop.f32.mrb[0].mxu0
    %v576 = vadd.f32 0.0, %v575
    %v577 = vpop.f32.mrb[0].mxu0
    %v578 = vpop.f32.mrb[0].mxu0
    %v579 = vadd.f32 0.0, %v578
    %v580 = vpop.f32.mrb[0].mxu0
    %581 = vmatprep.mubr.bf16.mxu0 %v300
    %582 = vmatmul.mubr.bf16.gmra.mrb[0].mxu0 %v299
    %v583 = vpop.f32.mrb[0].mxu0
    %v584 = vadd.f32 0.0, %v583
    %v585 = vpop.f32.mrb[0].mxu0
    %v586 = vpop.f32.mrb[0].mxu0
    %v587 = vadd.f32 0.0, %v586
    %v588 = vpop.f32.mrb[0].mxu0
    %589 = vdwg.mxu0
    %v590 = vadd.f32 %v77, %v464
    %v591 = vadd.f32 %v78, %v467
    %v592 = vadd.f32 %v79, %v472
    %v593 = vadd.f32 %v80, %v475
    %v594 = vadd.f32 %v81, %v480
    %v595 = vadd.f32 %v82, %v483
    %v596 = vadd.f32 %v83, %v488
    %v597 = vadd.f32 %v84, %v491
    %v598 = vadd.f32 %v85, %v496
    %v599 = vadd.f32 %v86, %v499
    %v600 = vadd.f32 %v87, %v504
    %v601 = vadd.f32 %v88, %v507
    %v602 = vadd.f32 %v89, %v512
    %v603 = vadd.f32 %v90, %v515
    %v604 = vadd.f32 %v91, %v520
    %v605 = vadd.f32 %v92, %v523
    %v606 = vadd.f32 %v93, %v528
    %v607 = vadd.f32 %v94, %v531
    %v608 = vadd.f32 %v95, %v536
    %v609 = vadd.f32 %v96, %v539
    %v610 = vadd.f32 %v97, %v544
    %v611 = vadd.f32 %v98, %v547
    %v612 = vadd.f32 %v99, %v552
    %v613 = vadd.f32 %v100, %v555
    %v614 = vadd.f32 %v101, %v560
    %v615 = vadd.f32 %v102, %v563
    %v616 = vadd.f32 %v103, %v568
    %v617 = vadd.f32 %v104, %v571
    %v618 = vadd.f32 %v105, %v576
    %v619 = vadd.f32 %v106, %v579
    %v620 = vadd.f32 %v107, %v584
    %v621 = vadd.f32 %v108, %v587
    %622 = vst [vmem:[#allocation2] sm:$0xff] %v590
    %623 = vst [vmem:[#allocation2 + $0x8] sm:$0xff] %v591
    %624 = vst [vmem:[#allocation2 + $0x10] sm:$0xff] %v592
    %625 = vst [vmem:[#allocation2 + $0x18] sm:$0xff] %v593
    %626 = vst [vmem:[#allocation2 + $0x20] sm:$0xff] %v594
    %627 = vst [vmem:[#allocation2 + $0x28] sm:$0xff] %v595
    %628 = vst [vmem:[#allocation2 + $0x30] sm:$0xff] %v596
    %629 = vst [vmem:[#allocation2 + $0x38] sm:$0xff] %v597
    %630 = vst [vmem:[#allocation2 + $0x40] sm:$0xff] %v598
    %631 = vst [vmem:[#allocation2 + $0x48] sm:$0xff] %v599
    %632 = vst [vmem:[#allocation2 + $0x50] sm:$0xff] %v600
    %633 = vst [vmem:[#allocation2 + $0x58] sm:$0xff] %v601
    %634 = vst [vmem:[#allocation2 + $0x60] sm:$0xff] %v602
    %635 = vst [vmem:[#allocation2 + $0x68] sm:$0xff] %v603
    %636 = vst [vmem:[#allocation2 + $0x70] sm:$0xff] %v604
    %637 = vst [vmem:[#allocation2 + $0x78] sm:$0xff] %v605
    %638 = vst [vmem:[#allocation2 + $0x80] sm:$0xff] %v606
    %639 = vst [vmem:[#allocation2 + $0x88] sm:$0xff] %v607
    %640 = vst [vmem:[#allocation2 + $0x90] sm:$0xff] %v608
    %641 = vst [vmem:[#allocation2 + $0x98] sm:$0xff] %v609
    %642 = vst [vmem:[#allocation2 + $0xa0] sm:$0xff] %v610
    %643 = vst [vmem:[#allocation2 + $0xa8] sm:$0xff] %v611
    %644 = vst [vmem:[#allocation2 + $0xb0] sm:$0xff] %v612
    %645 = vst [vmem:[#allocation2 + $0xb8] sm:$0xff] %v613
    %646 = vst [vmem:[#allocation2 + $0xc0] sm:$0xff] %v614
    %647 = vst [vmem:[#allocation2 + $0xc8] sm:$0xff] %v615
    %648 = vst [vmem:[#allocation2 + $0xd0] sm:$0xff] %v616
    %649 = vst [vmem:[#allocation2 + $0xd8] sm:$0xff] %v617
    %650 = vst [vmem:[#allocation2 + $0xe0] sm:$0xff] %v618
    %651 = vst [vmem:[#allocation2 + $0xe8] sm:$0xff] %v619
    %652 = vst [vmem:[#allocation2 + $0xf0] sm:$0xff] %v620
    %653 = vst [vmem:[#allocation2 + $0xf8] sm:$0xff] %v621
    // Predicated region
    $region22: #{tpu_custom_call.1} parent=1 // pred_check
      %p654 = pneg %p41
    $region23: #{tpu_custom_call.1} parent=1 // pred_check_branch
      %656 = sbr.rel (%p654) target = $region25
    $region24: #{tpu_custom_call.1} parent=1 // pred_region
      %v657 = vld [vmem:[#allocation2] sm:$0xff]
      %v658 = vld [vmem:[#allocation2 + $0x8] sm:$0xff]
      %v659 = vld [vmem:[#allocation2 + $0x10] sm:$0xff]
      %v660 = vld [vmem:[#allocation2 + $0x18] sm:$0xff]
      %v661 = vld [vmem:[#allocation2 + $0x20] sm:$0xff]
      %v662 = vld [vmem:[#allocation2 + $0x28] sm:$0xff]
      %v663 = vld [vmem:[#allocation2 + $0x30] sm:$0xff]
      %v664 = vld [vmem:[#allocation2 + $0x38] sm:$0xff]
      %v665 = vld [vmem:[#allocation2 + $0x40] sm:$0xff]
      %v666 = vld [vmem:[#allocation2 + $0x48] sm:$0xff]
      %v667 = vld [vmem:[#allocation2 + $0x50] sm:$0xff]
      %v668 = vld [vmem:[#allocation2 + $0x58] sm:$0xff]
      %v669 = vld [vmem:[#allocation2 + $0x60] sm:$0xff]
      %v670 = vld [vmem:[#allocation2 + $0x68] sm:$0xff]
      %v671 = vld [vmem:[#allocation2 + $0x70] sm:$0xff]
      %v672 = vld [vmem:[#allocation2 + $0x78] sm:$0xff]
      %v673 = vld [vmem:[#allocation2 + $0x80] sm:$0xff]
      %v674 = vld [vmem:[#allocation2 + $0x88] sm:$0xff]
      %v675 = vld [vmem:[#allocation2 + $0x90] sm:$0xff]
      %v676 = vld [vmem:[#allocation2 + $0x98] sm:$0xff]
      %v677 = vld [vmem:[#allocation2 + $0xa0] sm:$0xff]
      %v678 = vld [vmem:[#allocation2 + $0xa8] sm:$0xff]
      %v679 = vld [vmem:[#allocation2 + $0xb0] sm:$0xff]
      %v680 = vld [vmem:[#allocation2 + $0xb8] sm:$0xff]
      %v681 = vld [vmem:[#allocation2 + $0xc0] sm:$0xff]
      %v682 = vld [vmem:[#allocation2 + $0xc8] sm:$0xff]
      %v683 = vld [vmem:[#allocation2 + $0xd0] sm:$0xff]
      %v684 = vld [vmem:[#allocation2 + $0xd8] sm:$0xff]
      %v685 = vld [vmem:[#allocation2 + $0xe0] sm:$0xff]
      %v686 = vld [vmem:[#allocation2 + $0xe8] sm:$0xff]
      %v687 = vld [vmem:[#allocation2 + $0xf0] sm:$0xff]
      %v688 = vld [vmem:[#allocation2 + $0xf8] sm:$0xff]
      %v689 = vmax.f32 %v657, 0.0
      %v690 = vmax.f32 %v658, 0.0
      %v691 = vmax.f32 %v659, 0.0
      %v692 = vmax.f32 %v660, 0.0
      %v693 = vmax.f32 %v661, 0.0
      %v694 = vmax.f32 %v662, 0.0
      %v695 = vmax.f32 %v663, 0.0
      %v696 = vmax.f32 %v664, 0.0
      %v697 = vmax.f32 %v665, 0.0
      %v698 = vmax.f32 %v666, 0.0
      %v699 = vmax.f32 %v667, 0.0
      %v700 = vmax.f32 %v668, 0.0
      %v701 = vmax.f32 %v669, 0.0
      %v702 = vmax.f32 %v670, 0.0
      %v703 = vmax.f32 %v671, 0.0
      %v704 = vmax.f32 %v672, 0.0
      %v705 = vmax.f32 %v673, 0.0
      %v706 = vmax.f32 %v674, 0.0
      %v707 = vmax.f32 %v675, 0.0
      %v708 = vmax.f32 %v676, 0.0
      %v709 = vmax.f32 %v677, 0.0
      %v710 = vmax.f32 %v678, 0.0
      %v711 = vmax.f32 %v679, 0.0
      %v712 = vmax.f32 %v680, 0.0
      %v713 = vmax.f32 %v681, 0.0
      %v714 = vmax.f32 %v682, 0.0
      %v715 = vmax.f32 %v683, 0.0
      %v716 = vmax.f32 %v684, 0.0
      %v717 = vmax.f32 %v685, 0.0
      %v718 = vmax.f32 %v686, 0.0
      %v719 = vmax.f32 %v687, 0.0
      %v720 = vmax.f32 %v688, 0.0
      %721 = vst [vmem:[#allocation8] sm:$0xff] %v689
      %722 = vst [vmem:[#allocation8 + $0x8] sm:$0xff] %v690
      %723 = vst [vmem:[#allocation8 + $0x10] sm:$0xff] %v691
      %724 = vst [vmem:[#allocation8 + $0x18] sm:$0xff] %v692
      %725 = vst [vmem:[#allocation8 + $0x20] sm:$0xff] %v693
      %726 = vst [vmem:[#allocation8 + $0x28] sm:$0xff] %v694
      %727 = vst [vmem:[#allocation8 + $0x30] sm:$0xff] %v695
      %728 = vst [vmem:[#allocation8 + $0x38] sm:$0xff] %v696
      %729 = vst [vmem:[#allocation8 + $0x40] sm:$0xff] %v697
      %730 = vst [vmem:[#allocation8 + $0x48] sm:$0xff] %v698
      %731 = vst [vmem:[#allocation8 + $0x50] sm:$0xff] %v699
      %732 = vst [vmem:[#allocation8 + $0x58] sm:$0xff] %v700
      %733 = vst [vmem:[#allocation8 + $0x60] sm:$0xff] %v701
      %734 = vst [vmem:[#allocation8 + $0x68] sm:$0xff] %v702
      %735 = vst [vmem:[#allocation8 + $0x70] sm:$0xff] %v703
      %736 = vst [vmem:[#allocation8 + $0x78] sm:$0xff] %v704
      %737 = vst [vmem:[#allocation8 + $0x80] sm:$0xff] %v705
      %738 = vst [vmem:[#allocation8 + $0x88] sm:$0xff] %v706
      %739 = vst [vmem:[#allocation8 + $0x90] sm:$0xff] %v707
      %740 = vst [vmem:[#allocation8 + $0x98] sm:$0xff] %v708
      %741 = vst [vmem:[#allocation8 + $0xa0] sm:$0xff] %v709
      %742 = vst [vmem:[#allocation8 + $0xa8] sm:$0xff] %v710
      %743 = vst [vmem:[#allocation8 + $0xb0] sm:$0xff] %v711
      %744 = vst [vmem:[#allocation8 + $0xb8] sm:$0xff] %v712
      %745 = vst [vmem:[#allocation8 + $0xc0] sm:$0xff] %v713
      %746 = vst [vmem:[#allocation8 + $0xc8] sm:$0xff] %v714
      %747 = vst [vmem:[#allocation8 + $0xd0] sm:$0xff] %v715
      %748 = vst [vmem:[#allocation8 + $0xd8] sm:$0xff] %v716
      %749 = vst [vmem:[#allocation8 + $0xe0] sm:$0xff] %v717
      %750 = vst [vmem:[#allocation8 + $0xe8] sm:$0xff] %v718
      %751 = vst [vmem:[#allocation8 + $0xf0] sm:$0xff] %v719
      %752 = vst [vmem:[#allocation8 + $0xf8] sm:$0xff] %v720
    $region25: #{tpu_custom_call.1} parent=1 // pred_fallthru
      _
    // Predicated region
    $region26: #{tpu_custom_call.1} parent=1 // pred_check
      _
    $region27: #{tpu_custom_call.1} parent=1 // pred_check_branch
      %754 = sbr.rel (0) target = $region29
    $region28: #{tpu_custom_call.1} parent=1 // pred_region
      %s756 = ssub.s32 4096, 4096
      %757 = vsyncadd [#allocation5], %s756
      %s758 = sshll.u32 [#allocation8], 4
      %s759 = int_to_ptr.vmem [resolvable:$true] %s758
      %764 = dma.vmem_to_hbm [thread:$0]  %s759, 4096, %s2, [#allocation5], 128, 128, 8
    $region29: #{tpu_custom_call.1} parent=1 // pred_fallthru
      _
    // Predicated region
    $region30: #{tpu_custom_call.1} parent=1 // pred_check
      _
    $region31: #{tpu_custom_call.1} parent=1 // pred_check_branch
      %766 = sbr.rel (0) target = $region33
    $region32: #{tpu_custom_call.1} parent=1 // pred_region
      %767 = dma.done [#allocation5], 4096
    $region33: #{tpu_custom_call.1} parent=1 // pred_fallthru
      _
    %768 = vsyncpa [#allocation4], 1
    %769 = vsyncpa [#allocation7], 1
    %770 = vsyncpa [#allocation5], 1

</llo_original>
